<compile_context>
chip_gen: v5e
topology: v5e:2x2
jax: 0.10.0
libtpu: 0.0.40
codegen_flags: <defaults>
</compile_context>

<pallas_src>
import math

import jax
import jax.numpy as jnp
from jax.experimental import pallas as pl
from jax.experimental.pallas import tpu as pltpu

B, N, D, DH = 1, 8, 64, 8  # small shapes consistent with the module (N == DH)
_BIAS_ROWS = 8             # one full sublane tile for the replicated bias


def attn_kernel(x_ref, p_ref, o_ref):
    d = x_ref.shape[-1]
    dh = p_ref.shape[-1] // 3

    x = x_ref[0]                       # (N, D); batch == 1 in this module
    w_qkv = p_ref[:d, :]               # (D, 3*DH)  D % 8 == 0 -> full sublane tiles
    b_qkv = p_ref[d:, :]               # (8, 3*DH)  bias replicated over a full tile

    # Fused Q/K/V projection: one MXU matmul + plain elementwise bias add
    # (bias rows pre-replicated host-side; valid because N == 8 == _BIAS_ROWS).
    qkv = jnp.dot(x, w_qkv, preferred_element_type=jnp.float32) + b_qkv
    q = qkv[:, :dh]
    k = qkv[:, dh:2 * dh]
    v = qkv[:, 2 * dh:]
    bv = b_qkv[:, 2 * dh:]             # (8, DH), every row == v-bias

    # v0[i,j] = sum_d q[i,d] * k[j,d]   (contract last dims; no operand .T)
    scores = jax.lax.dot_general(
        q, k, (((1,), (1,)), ((), ())),
        preferred_element_type=jnp.float32) * (1.0 / math.sqrt(dh))

    # v1 = v0 + v.bias broadcast along the last dim (valid because N == DH).
    scores = scores + bv

    # v2 = softmax(v1, dim=-1), max-stabilized; exact divide keeps 1e-5 tol.
    m = jnp.max(scores, axis=-1, keepdims=True)
    e = jnp.exp(scores - m)
    p = e / jnp.sum(e, axis=-1, keepdims=True)

    # v5[i,j] = sum_k p[k,i] * v[j,k] == (v @ p).T -> single 8x8 result transpose.
    tmp = jnp.dot(v, p, preferred_element_type=jnp.float32)
    o_ref[0] = tmp.T.astype(o_ref.dtype)


def pack_params(wq, wk, wv, bq, bk, bv):
    """Pack weights + biases ONCE (at weight-load time) into (D+8, 3*DH).

    Rows [0, D)   : [wq | wk | wv]
    Rows [D, D+8) : [bq | bk | bv] replicated into a full sublane tile so the
                    kernel's bias slice is tile-aligned and needs no broadcast.
    """
    w = jnp.concatenate([wq, wk, wv], axis=1)                    # (D, 3*DH)
    b = jnp.concatenate([bq, bk, bv], axis=1)                    # (1, 3*DH)
    b_tile = jnp.broadcast_to(b, (_BIAS_ROWS, b.shape[-1]))      # (8, 3*DH)
    return jnp.concatenate([w, b_tile], axis=0)                  # (D+8, 3*DH)


@jax.jit
def model_forward(x, params):
    b, n, d = x.shape
    dh = params.shape[-1] // 3
    cost = pl.CostEstimate(
        flops=2 * b * (n * d * 3 * dh + 2 * n * n * dh),
        transcendentals=b * n * n,
        bytes_accessed=4 * (x.size + params.size + b * n * n),
    )
    # B == 1: no grid at all -> whole arrays resident in VMEM, no pipeline
    # prologue/epilogue and no dead size-1 "parallel" axis on v7x.
    return pl.pallas_call(
        attn_kernel,
        out_shape=jax.ShapeDtypeStruct((b, n, n), x.dtype),
        in_specs=[
            pl.BlockSpec(memory_space=pltpu.MemorySpace.VMEM),
            pl.BlockSpec(memory_space=pltpu.MemorySpace.VMEM),
        ],
        out_specs=pl.BlockSpec(memory_space=pltpu.MemorySpace.VMEM),
        cost_estimate=cost,
    )(x, params)


def ref_forward(x, wq, wk, wv, bq, bk, bv):
    q = x @ wq + bq
    k = x @ wk + bk
    v = x @ wv + bv
    s = jnp.einsum("bik,bjk->bij", q, k) / math.sqrt(q.shape[-1])
    s = s + bv  # (1, DH) broadcasts over (B, N, N) since N == DH
    p = jax.nn.softmax(s, axis=-1)
    return jnp.einsum("bki,bjk->bij", p, v)


if __name__ == "__main__":
    key = jax.random.PRNGKey(0)
    kx, kq, kk, kv, kbq, kbk, kbv = jax.random.split(key, 7)

    bound = 1.0 / math.sqrt(D)  # PyTorch nn.Linear default init range
    x = jax.random.normal(kx, (B, N, D), dtype=jnp.float32)
    wq = jax.random.uniform(kq, (D, DH), jnp.float32, -bound, bound)
    wk = jax.random.uniform(kk, (D, DH), jnp.float32, -bound, bound)
    wv = jax.random.uniform(kv, (D, DH), jnp.float32, -bound, bound)
    bq = jax.random.uniform(kbq, (1, DH), jnp.float32, -bound, bound)
    bk = jax.random.uniform(kbk, (1, DH), jnp.float32, -bound, bound)
    bv = jax.random.uniform(kbv, (1, DH), jnp.float32, -bound, bound)

    # Packing happens ONCE here (weight-load time), not per forward call.
    params = jax.block_until_ready(pack_params(wq, wk, wv, bq, bk, bv))

    out = jax.block_until_ready(model_forward(x, params))

    ref = ref_forward(x, wq, wk, wv, bq, bk, bv)
    assert out.shape == (B, N, N)
    assert jnp.allclose(out, ref, atol=1e-5, rtol=1e-5)

    print("KERNEL_OK")
</pallas_src>

<mosaic_0001>
module attributes {stable_mosaic.version = 11 : i64} {
  func.func @attn_kernel(%arg0: memref<1x8x64xf32, #tpu.memory_space<vmem>>, %arg1: memref<72x24xf32, #tpu.memory_space<vmem>>, %arg2: memref<1x8x8xf32, #tpu.memory_space<vmem>>) attributes {dimension_semantics = [], scalar_prefetch = 0 : i64, scratch_operands = 0 : i64, tpu.core_type = #tpu.core_type<tc>} {
    %c0 = arith.constant 0 : index
    %c0_0 = arith.constant 0 : index
    %c0_1 = arith.constant 0 : index
    %0 = vector.load %arg0[%c0, %c0_0, %c0_1] : memref<1x8x64xf32, #tpu.memory_space<vmem>>, vector<1x8x64xf32>
    %1 = vector.shape_cast %0 : vector<1x8x64xf32> to vector<8x64xf32>
    %c0_2 = arith.constant 0 : index
    %c0_3 = arith.constant 0 : index
    %2 = vector.load %arg1[%c0_2, %c0_3] : memref<72x24xf32, #tpu.memory_space<vmem>>, vector<64x24xf32>
    %c64 = arith.constant 64 : index
    %c0_4 = arith.constant 0 : index
    %3 = vector.load %arg1[%c64, %c0_4] : memref<72x24xf32, #tpu.memory_space<vmem>>, vector<8x24xf32>
    %cst = arith.constant dense<0.000000e+00> : vector<8x24xf32>
    %4 = tpu.matmul %1, %2, %cst {dimension_numbers = #tpu.dot_dimension_numbers<[1], [0], [0], [1], [0, 0, 1, 1], [], []>} : vector<8x64xf32>, vector<64x24xf32>, vector<8x24xf32> -> vector<8x24xf32>
    %5 = arith.addf %4, %3 : vector<8x24xf32>
    %6 = vector.extract_strided_slice %5 {offsets = [0, 0], sizes = [8, 8], strides = [1, 1]} : vector<8x24xf32> to vector<8x8xf32>
    %7 = vector.extract_strided_slice %5 {offsets = [0, 8], sizes = [8, 8], strides = [1, 1]} : vector<8x24xf32> to vector<8x8xf32>
    %8 = vector.extract_strided_slice %5 {offsets = [0, 16], sizes = [8, 8], strides = [1, 1]} : vector<8x24xf32> to vector<8x8xf32>
    %9 = vector.extract_strided_slice %3 {offsets = [0, 16], sizes = [8, 8], strides = [1, 1]} : vector<8x24xf32> to vector<8x8xf32>
    %cst_5 = arith.constant dense<0.000000e+00> : vector<8x8xf32>
    %10 = tpu.matmul %6, %7, %cst_5 {dimension_numbers = #tpu.dot_dimension_numbers<[1], [1], [0], [0], [0, 0, 1, 0], [], []>} : vector<8x8xf32>, vector<8x8xf32>, vector<8x8xf32> -> vector<8x8xf32>
    %cst_6 = arith.constant 0.353553385 : f32
    %11 = vector.broadcast %cst_6 : f32 to vector<8x8xf32>
    %12 = arith.mulf %10, %11 : vector<8x8xf32>
    %13 = arith.addf %12, %9 : vector<8x8xf32>
    %cst_7 = arith.constant dense<0xFF800000> : vector<8xf32>
    %14 = vector.multi_reduction <maximumf>, %13, %cst_7 [1] : vector<8x8xf32> to vector<8xf32>
    %15 = vector.shape_cast %14 : vector<8xf32> to vector<8x1xf32>
    %16 = vector.broadcast %15 : vector<8x1xf32> to vector<8x8xf32>
    %17 = arith.subf %13, %16 : vector<8x8xf32>
    %18 = math.exp %17 : vector<8x8xf32>
    %cst_8 = arith.constant dense<0.000000e+00> : vector<8xf32>
    %19 = vector.multi_reduction <add>, %18, %cst_8 [1] : vector<8x8xf32> to vector<8xf32>
    %20 = vector.shape_cast %19 : vector<8xf32> to vector<8x1xf32>
    %21 = vector.broadcast %20 : vector<8x1xf32> to vector<8x8xf32>
    %22 = arith.divf %18, %21 : vector<8x8xf32>
    %cst_9 = arith.constant dense<0.000000e+00> : vector<8x8xf32>
    %23 = tpu.matmul %8, %22, %cst_9 {dimension_numbers = #tpu.dot_dimension_numbers<[1], [0], [0], [1], [0, 0, 1, 1], [], []>} : vector<8x8xf32>, vector<8x8xf32>, vector<8x8xf32> -> vector<8x8xf32>
    %24 = tpu.transpose %23, [1, 0] : vector<8x8xf32> -> vector<8x8xf32>
    %c0_10 = arith.constant 0 : index
    %c0_11 = arith.constant 0 : index
    %c0_12 = arith.constant 0 : index
    %25 = vector.load %arg2[%c0_10, %c0_11, %c0_12] : memref<1x8x8xf32, #tpu.memory_space<vmem>>, vector<1x8x8xf32>
    %26 = vector.shape_cast %25 : vector<1x8x8xf32> to vector<8x8xf32>
    %27 = vector.shape_cast %24 : vector<8x8xf32> to vector<1x8x8xf32>
    tpu.vector_store %arg2[%c0_10, %c0_11, %c0_12], %27 {strides = array<i32>} : memref<1x8x8xf32, #tpu.memory_space<vmem>>, vector<1x8x8xf32>,
    return
  }
}

</mosaic_0001>

<llo_original>
// kernel: model_forward.1
$region0: #{model_forward.1}
  #allocation0 [shape = 'u32[]', space=smem, size = 0x4, offset = 0x4, fixed_abs, tag = 'smem constant byte address 0x4 - core index']
  #allocation1 [shape = 'u32[72,128]{1,0:T(1,128)}', space=vmem, size = 0x9000, scoped, tag = 'internal scratch']
  %s0 = inlined_call_operand.vmem [shape: f32[1,8,64], index: 0, kind: input, shape index: {}]
  %s1 = inlined_call_operand.vmem [shape: f32[72,24], index: 1, kind: input, shape index: {}]
  %s2 = inlined_call_operand.hbm [shape: f32[1,8,8], index: 2, kind: output, shape index: {}]
  %s3 = sld [smem:[#allocation0]]
  $region18: #{model_forward.1} parent=0
    _
  %s5 = ssub.s32 1, %s3
  %s6 = scalar_select 0, %s5, %s3
  $region1: #{model_forward.1} parent=0
    #allocation2 [shape = 'u8[4096]{0}', space=vmem, size = 0x1000, scoped, tag = 'output window, operand 0, single buffered']
    #allocation3 [shape = 's32[1]{0}', space=sflag, size = 0x4, scoped, tag = 'scoped memory for model_forward.1']
    %7 = vsyncpa [#allocation3], 0
    // Predicated region
    $region2: #{model_forward.1} parent=1 // pred_check
      _
    $region3: #{model_forward.1} parent=1 // pred_check_branch
      %9 = sbr.rel (0) target = $region5
    $region4: #{model_forward.1} parent=1 // pred_region
      _
    $region5: #{model_forward.1} parent=1 // pred_fallthru
      _
    // Predicated region
    $region6: #{model_forward.1} parent=1 // pred_check
      _
    $region7: #{model_forward.1} parent=1 // pred_check_branch
      %11 = sbr.rel (0) target = $region9
    $region8: #{model_forward.1} parent=1 // pred_region
      _
    $region9: #{model_forward.1} parent=1 // pred_fallthru
      _
    %v12 = vld [vmem:[%s0] sm:$0xff]
    %v13 = vld [vmem:[%s1] sm:$0xff]
    %v14 = vld [vmem:[%s1 + $0x8] sm:$0xff]
    %v15 = vld [vmem:[%s1 + $0x10] sm:$0xff]
    %v16 = vld [vmem:[%s1 + $0x18] sm:$0xff]
    %v17 = vld [vmem:[%s1 + $0x20] sm:$0xff]
    %v18 = vld [vmem:[%s1 + $0x28] sm:$0xff]
    %v19 = vld [vmem:[%s1 + $0x30] sm:$0xff]
    %v20 = vld [vmem:[%s1 + $0x38] sm:$0xff]
    %v21 = vld [vmem:[%s1 + $0x40] sm:$0xff]
    %vm22 = vcmask 523264
    %v24 = vsel %vm22, %v12, 0
    %26 = vmatpush.msra.mxu0 0.0
    %27 = vmatpush.msra.mxu0 0.0
    %28 = vmatpush.msra.mxu0 0.0
    %29 = vmatpush.msra.mxu0 0.0
    %30 = vmatpush.msra.mxu0 0.0
    %31 = vmatpush.msra.mxu0 0.0
    %32 = vmatpush.msra.mxu0 0.0
    %33 = vmatpush.msra.mxu0 0.0
    %34 = vmatpush.msra.mxu0 %v20
    %35 = vmatpush.msra.mxu0 %v19
    %36 = vmatpush.msra.mxu0 %v18
    %37 = vmatpush.msra.mxu0 %v17
    %38 = vmatpush.msra.mxu0 %v16
    %39 = vmatpush.msra.mxu0 %v15
    %40 = vmatpush.msra.mxu0 %v14
    %41 = vmatpush.msra.mxu0 %v13
    %42 = vmatmul.f32.gmra.mxu0 %v24
    %v43 = vpop.f32.mrf.mxu0
    %v44 = vadd.f32 %v21, %v43
    %45 = vdwg.mxu0
    %47 = vrot.lane.b32.xlu0 %v44, 120
    %v48 = vpop.permute.xlu0 %47
    %vm49 = vcmask 64512
    %v50 = vsel %vm49, %v44, 0
    %v52 = vsel %vm49, %v48, 0
    %54 = vmatpush.xpose.msra.mxu0 0.0
    %55 = vmatpush.xpose.msra.mxu0 0.0
    %56 = vmatpush.xpose.msra.mxu0 0.0
    %57 = vmatpush.xpose.msra.mxu0 0.0
    %58 = vmatpush.xpose.msra.mxu0 0.0
    %59 = vmatpush.xpose.msra.mxu0 0.0
    %60 = vmatpush.xpose.msra.mxu0 0.0
    %61 = vmatpush.xpose.msra.mxu0 0.0
    %62 = vmatpush.xpose.msra.mxu0 0.0
    %63 = vmatpush.xpose.msra.mxu0 0.0
    %64 = vmatpush.xpose.msra.mxu0 0.0
    %65 = vmatpush.xpose.msra.mxu0 0.0
    %66 = vmatpush.xpose.msra.mxu0 0.0
    %67 = vmatpush.xpose.msra.mxu0 0.0
    %68 = vmatpush.xpose.msra.mxu0 0.0
    %69 = vmatpush.xpose.msra.mxu0 %v52
    %70 = vmatmul.f32.gmra.mxu0 %v50
    %v71 = vpop.f32.mrf.mxu0
    %v72 = vadd.f32 0.0, %v71
    %73 = vdwg.mxu0
    %v74 = vmul.f32 %v72, 0.35355338
    %76 = vrot.lane.b32.xlu0 %v21, 112
    %v77 = vpop.permute.xlu0 %76
    %v79 = vadd.f32 %v74, %v77
    %v80 = vsel %vm49, %v79, -inf
    %81 = vmax.xlane.f32.xlu0 %v80
    %v82 = vpop.xlane.xlu0 %81
    %v83 = vsub.f32 %v79, %v82
    %v84 = vmul.f32 %v83, 1.442695
    %v85 = vpow.pop %v84
    %v86 = vsel %vm49, %v85, 0.0
    %87 = vadd.xlane.f32.xlu0 %v86
    %v88 = vpop.xlane.xlu0 %87
    %v89 = vrcp.pop %v88
    %v90 = vmul.f32 %v88, %v89
    %v91 = vsub.f32 1.0, %v90
    %v92 = vmul.f32 %v89, %v91
    %v93 = vadd.f32 %v89, %v92
    %vm94 = vweird.f32 %v88
    %vm95 = vweird.f32 %v89
    %vm96 = vmor %vm94, %vm95
    %v97 = vsel %vm96, %v89, %v93
    %v98 = vand.u32 2147483647, %v88
    %vm99 = vcmp.eq.f32.partialorder %v98, 8.507059e+37
    %v100 = vand.u32 %v88, 2147483648
    %v101 = vor.u32 1.1754944e-38, %v100
    %v102 = vsel %vm99, %v101, %v97
    %v103 = vmul.f32 %v85, %v102
    %104 = vrot.lane.b32.xlu0 %v44, 112
    %v105 = vpop.permute.xlu0 %104
    %v106 = vsel %vm49, %v105, 0
    %108 = vmatpush.msra.mxu0 0.0
    %109 = vmatpush.msra.mxu0 0.0
    %110 = vmatpush.msra.mxu0 0.0
    %111 = vmatpush.msra.mxu0 0.0
    %112 = vmatpush.msra.mxu0 0.0
    %113 = vmatpush.msra.mxu0 0.0
    %114 = vmatpush.msra.mxu0 0.0
    %115 = vmatpush.msra.mxu0 0.0
    %116 = vmatpush.msra.mxu0 0.0
    %117 = vmatpush.msra.mxu0 0.0
    %118 = vmatpush.msra.mxu0 0.0
    %119 = vmatpush.msra.mxu0 0.0
    %120 = vmatpush.msra.mxu0 0.0
    %121 = vmatpush.msra.mxu0 0.0
    %122 = vmatpush.msra.mxu0 0.0
    %123 = vmatpush.msra.mxu0 %v103
    %124 = vmatmul.f32.gmra.mxu0 %v106
    %v125 = vpop.f32.mrf.mxu0
    %v126 = vadd.f32 0.0, %v125
    %127 = vdwg.mxu0
    %128 = vxpose.xlu0.b32.start [1/16] %v126, 128
    %129 = vxpose.xlu0.b32.cont [2/16] 0.0, 128
    %130 = vxpose.xlu0.b32.cont [3/16] 0.0, 128
    %131 = vxpose.xlu0.b32.cont [4/16] 0.0, 128
    %132 = vxpose.xlu0.b32.cont [5/16] 0.0, 128
    %133 = vxpose.xlu0.b32.cont [6/16] 0.0, 128
    %134 = vxpose.xlu0.b32.cont [7/16] 0.0, 128
    %135 = vxpose.xlu0.b32.cont [8/16] 0.0, 128
    %136 = vxpose.xlu0.b32.cont [9/16] 0.0, 128
    %137 = vxpose.xlu0.b32.cont [10/16] 0.0, 128
    %138 = vxpose.xlu0.b32.cont [11/16] 0.0, 128
    %139 = vxpose.xlu0.b32.cont [12/16] 0.0, 128
    %140 = vxpose.xlu0.b32.cont [13/16] 0.0, 128
    %141 = vxpose.xlu0.b32.cont [14/16] 0.0, 128
    %142 = vxpose.xlu0.b32.cont [15/16] 0.0, 128
    %143 = vxpose.xlu0.b32.end [16/16] 0.0, 128
    %v144 = vpop.trf.xlu0
    %v145 = vpop.trf.xlu0
    %v146 = vpop.trf.xlu0
    %v147 = vpop.trf.xlu0
    %v148 = vpop.trf.xlu0
    %v149 = vpop.trf.xlu0
    %v150 = vpop.trf.xlu0
    %v151 = vpop.trf.xlu0
    %v152 = vpop.trf.xlu0
    %v153 = vpop.trf.xlu0
    %v154 = vpop.trf.xlu0
    %v155 = vpop.trf.xlu0
    %v156 = vpop.trf.xlu0
    %v157 = vpop.trf.xlu0
    %v158 = vpop.trf.xlu0
    %v159 = vpop.trf.xlu0
    %160 = vst.msk [vmem:[#allocation2] sm:$0xff] %vm49, %v144
    // Predicated region
    $region10: #{model_forward.1} parent=1 // pred_check
      _
    $region11: #{model_forward.1} parent=1 // pred_check_branch
      %162 = sbr.rel (0) target = $region13
    $region12: #{model_forward.1} parent=1 // pred_region
      %164 = vsyncadd [#allocation3], 0
      %s166 = sshll.u32 [#allocation2], 4
      %s167 = int_to_ptr.vmem [resolvable:$true] %s166
      %s168 = sshll.u32 %s2, 4
      %s169 = int_to_ptr.hbm [resolvable:$true] %s168
      %171 = dma.vmem_to_hbm [thread:$0]  %s167, 128, %s169, [#allocation3]
    $region13: #{model_forward.1} parent=1 // pred_fallthru
      _
    // Predicated region
    $region14: #{model_forward.1} parent=1 // pred_check
      _
    $region15: #{model_forward.1} parent=1 // pred_check_branch
      %173 = sbr.rel (0) target = $region17
    $region16: #{model_forward.1} parent=1 // pred_region
      %175 = dma.done [#allocation3], 128
    $region17: #{model_forward.1} parent=1 // pred_fallthru
      _
    %176 = vsyncpa [#allocation3], 1

</llo_original>
